<compile_context>
chip_gen: v5e
topology: v5e:2x2
jax: 0.10.0
libtpu: 0.0.40
codegen_flags: <defaults>
</compile_context>

<pallas_src>
import functools

import jax
import jax.numpy as jnp
from jax.experimental import pallas as pl
from jax.experimental.pallas import tpu as pltpu

LANE = 128     # vreg lane width; pad all feature dims to this.
SUBLANE = 8    # vreg sublane width; batch tiles must be a multiple of this.


def _round_up(n, m):
    return ((n + m - 1) // m) * m


def dqn_kernel(x_ref, w1_ref, b1_ref, w2_ref, b2_ref, w3_ref, b3_ref, o_ref):
    # fc1 + relu   (all operands are lane-dense [*, 128] tiles, f32 MXU acc)
    h1 = jnp.dot(x_ref[...], w1_ref[...], preferred_element_type=jnp.float32)
    h1 = jnp.maximum(h1 + b1_ref[...], 0.0)
    # fc2 + relu
    h2 = jnp.dot(h1, w2_ref[...], preferred_element_type=jnp.float32)
    h2 = jnp.maximum(h2 + b2_ref[...], 0.0)
    # fc3 (no activation)
    o = jnp.dot(h2, w3_ref[...], preferred_element_type=jnp.float32)
    o_ref[...] = (o + b3_ref[...]).astype(o_ref.dtype)


def init_dqn_params(key, input_size, output_size, hidden=64):
    """PyTorch nn.Linear-style init (uniform +/- 1/sqrt(fan_in)).

    Weights are stored [in_features, out_features] (transpose of torch) so the
    kernel computes y = x @ W + b directly.
    """
    def linear(key, fan_in, fan_out):
        kw, kb = jax.random.split(key)
        bound = 1.0 / jnp.sqrt(jnp.float32(fan_in))
        w = jax.random.uniform(kw, (fan_in, fan_out), jnp.float32, -bound, bound)
        b = jax.random.uniform(kb, (1, fan_out), jnp.float32, -bound, bound)
        return w, b

    k1, k2, k3 = jax.random.split(key, 3)
    w1, b1 = linear(k1, input_size, hidden)
    w2, b2 = linear(k2, hidden, hidden)
    w3, b3 = linear(k3, hidden, output_size)
    return dict(w1=w1, b1=b1, w2=w2, b2=b2, w3=w3, b3=b3)


def pad_dqn_params(params):
    """Zero-pad every feature dim up to a multiple of 128 lanes. Done ONCE.

    Zero padding is exact: padded input columns hit zero W1 rows, padded hidden
    units get zero weight columns + zero bias (relu(0)=0) and zero W rows into
    the next layer, and padded output columns are zero and sliced off.
    """
    def pad2(a, rows, cols):
        return jnp.pad(a, ((0, rows - a.shape[0]), (0, cols - a.shape[1])))

    in_p = _round_up(params["w1"].shape[0], LANE)
    h_p = _round_up(params["w1"].shape[1], LANE)
    out_p = _round_up(params["w3"].shape[1], LANE)
    return dict(
        w1=pad2(params["w1"], in_p, h_p), b1=pad2(params["b1"], 1, h_p),
        w2=pad2(params["w2"], h_p, h_p),  b2=pad2(params["b2"], 1, h_p),
        w3=pad2(params["w3"], h_p, out_p), b3=pad2(params["b3"], 1, out_p),
    )


def dqn_forward(x, padded_params, *, out_size, tb=256):
    """x: [B, input_size] f32. padded_params: output of pad_dqn_params."""
    w1, b1 = padded_params["w1"], padded_params["b1"]
    w2, b2 = padded_params["w2"], padded_params["b2"]
    w3, b3 = padded_params["w3"], padded_params["b3"]

    B, in_size = x.shape
    in_pad, h_pad = w1.shape
    out_pad = w3.shape[1]

    # Adaptive batch tile: a single minimal (multiple-of-8) tile for small
    # batches, `tb`-row tiles for large ones (fewer, bigger grid steps).
    tb_eff = min(tb, _round_up(max(B, 1), SUBLANE))
    b_pad = _round_up(max(B, 1), tb_eff)
    x_p = jnp.pad(x, ((0, b_pad - B), (0, in_pad - in_size)))
    grid = (b_pad // tb_eff,)

    # Weights/biases are grid-invariant: constant index_map keeps them resident
    # in VMEM across every batch tile (no re-DMA per step).
    resident = lambda a: pl.BlockSpec(a.shape, lambda i: (0,) * a.ndim)

    flops = 2 * b_pad * (in_pad * h_pad + h_pad * h_pad + h_pad * out_pad)
    bytes_accessed = 4 * (
        x_p.size + w1.size + b1.size + w2.size + b2.size + w3.size + b3.size
        + b_pad * out_pad
    )
    cost = pl.CostEstimate(flops=flops, transcendentals=0,
                           bytes_accessed=bytes_accessed)

    out_padded = pl.pallas_call(
        dqn_kernel,
        out_shape=jax.ShapeDtypeStruct((b_pad, out_pad), jnp.float32),
        grid=grid,
        in_specs=[
            pl.BlockSpec((tb_eff, in_pad), lambda i: (i, 0)),  # x tile, pipelined
            resident(w1), resident(b1),
            resident(w2), resident(b2),
            resident(w3), resident(b3),
        ],
        out_specs=pl.BlockSpec((tb_eff, out_pad), lambda i: (i, 0)),
        compiler_params=pltpu.CompilerParams(
            dimension_semantics=("parallel",),  # batch tiles shard across TCs
        ),
        cost_estimate=cost,
    )(x_p, w1, b1, w2, b2, w3, b3)

    return out_padded[:B, :out_size]


def dqn_reference(x, p):
    h1 = jnp.maximum(x @ p["w1"] + p["b1"], 0.0)
    h2 = jnp.maximum(h1 @ p["w2"] + p["b2"], 0.0)
    return h2 @ p["w3"] + p["b3"]


if __name__ == "__main__":
    key = jax.random.PRNGKey(0)
    kx, kx2, kp = jax.random.split(key, 3)

    input_size, output_size = 16, 4
    params = init_dqn_params(kp, input_size, output_size)
    padded_params = pad_dqn_params(params)  # pad once, reuse every call

    fwd = jax.jit(functools.partial(dqn_forward, out_size=output_size, tb=256))

    # Small batch (single-env action selection): one minimal 8-row tile.
    x_small = jax.random.normal(kx, (8, input_size), jnp.float32)
    out_small = jax.block_until_ready(fwd(x_small, padded_params))
    ref_small = dqn_reference(x_small, params)
    assert out_small.shape == (8, output_size)
    assert jnp.allclose(out_small, ref_small, atol=1e-5, rtol=1e-5)

    # Larger, ragged batch (replay-buffer evaluation): exercises the batch grid
    # (multiple pipelined 256-row steps) and the batch-padding path.
    x_big = jax.random.normal(kx2, (300, input_size), jnp.float32)
    out_big = jax.block_until_ready(fwd(x_big, padded_params))
    ref_big = dqn_reference(x_big, params)
    assert out_big.shape == (300, output_size)
    assert jnp.allclose(out_big, ref_big, atol=1e-5, rtol=1e-5)

    print("KERNEL_OK")
</pallas_src>

<mosaic_0001>
module attributes {stable_mosaic.version = 11 : i64} {
  func.func @dqn_kernel(%arg0: i32, %arg1: memref<8x128xf32, #tpu.memory_space<vmem>>, %arg2: memref<128x128xf32, #tpu.memory_space<vmem>>, %arg3: memref<1x128xf32, #tpu.memory_space<vmem>>, %arg4: memref<128x128xf32, #tpu.memory_space<vmem>>, %arg5: memref<1x128xf32, #tpu.memory_space<vmem>>, %arg6: memref<128x128xf32, #tpu.memory_space<vmem>>, %arg7: memref<1x128xf32, #tpu.memory_space<vmem>>, %arg8: memref<8x128xf32, #tpu.memory_space<vmem>>) attributes {dimension_semantics = [#tpu.dimension_semantics<parallel>], iteration_bounds = array<i64: 1>, scalar_prefetch = 0 : i64, scratch_operands = 0 : i64, tpu.core_type = #tpu.core_type<tc>, window_params = [{transform_indices = @transform_0, window_bounds = array<i64: 8, 128>}, {pipeline_mode = #tpu.pipeline_mode<synchronous>, transform_indices = @transform_1, window_bounds = array<i64: 128, 128>}, {pipeline_mode = #tpu.pipeline_mode<synchronous>, transform_indices = @transform_2, window_bounds = array<i64: 1, 128>}, {pipeline_mode = #tpu.pipeline_mode<synchronous>, transform_indices = @transform_3, window_bounds = array<i64: 128, 128>}, {pipeline_mode = #tpu.pipeline_mode<synchronous>, transform_indices = @transform_4, window_bounds = array<i64: 1, 128>}, {pipeline_mode = #tpu.pipeline_mode<synchronous>, transform_indices = @transform_5, window_bounds = array<i64: 128, 128>}, {pipeline_mode = #tpu.pipeline_mode<synchronous>, transform_indices = @transform_6, window_bounds = array<i64: 1, 128>}, {transform_indices = @transform_7, window_bounds = array<i64: 8, 128>}]} {
    %c0 = arith.constant 0 : index
    %c0_0 = arith.constant 0 : index
    %0 = vector.load %arg1[%c0, %c0_0] : memref<8x128xf32, #tpu.memory_space<vmem>>, vector<8x128xf32>
    %c0_1 = arith.constant 0 : index
    %c0_2 = arith.constant 0 : index
    %1 = vector.load %arg2[%c0_1, %c0_2] : memref<128x128xf32, #tpu.memory_space<vmem>>, vector<128x128xf32>
    %cst = arith.constant dense<0.000000e+00> : vector<8x128xf32>
    %2 = tpu.matmul %0, %1, %cst {dimension_numbers = #tpu.dot_dimension_numbers<[1], [0], [0], [1], [0, 0, 1, 1], [], []>} : vector<8x128xf32>, vector<128x128xf32>, vector<8x128xf32> -> vector<8x128xf32>
    %c0_3 = arith.constant 0 : index
    %c0_4 = arith.constant 0 : index
    %3 = vector.load %arg3[%c0_3, %c0_4] : memref<1x128xf32, #tpu.memory_space<vmem>>, vector<1x128xf32>
    %4 = vector.broadcast %3 : vector<1x128xf32> to vector<8x128xf32>
    %5 = arith.addf %2, %4 : vector<8x128xf32>
    %cst_5 = arith.constant 0.000000e+00 : f32
    %6 = vector.broadcast %cst_5 : f32 to vector<8x128xf32>
    %7 = arith.maximumf %5, %6 : vector<8x128xf32>
    %c0_6 = arith.constant 0 : index
    %c0_7 = arith.constant 0 : index
    %8 = vector.load %arg4[%c0_6, %c0_7] : memref<128x128xf32, #tpu.memory_space<vmem>>, vector<128x128xf32>
    %cst_8 = arith.constant dense<0.000000e+00> : vector<8x128xf32>
    %9 = tpu.matmul %7, %8, %cst_8 {dimension_numbers = #tpu.dot_dimension_numbers<[1], [0], [0], [1], [0, 0, 1, 1], [], []>} : vector<8x128xf32>, vector<128x128xf32>, vector<8x128xf32> -> vector<8x128xf32>
    %c0_9 = arith.constant 0 : index
    %c0_10 = arith.constant 0 : index
    %10 = vector.load %arg5[%c0_9, %c0_10] : memref<1x128xf32, #tpu.memory_space<vmem>>, vector<1x128xf32>
    %11 = vector.broadcast %10 : vector<1x128xf32> to vector<8x128xf32>
    %12 = arith.addf %9, %11 : vector<8x128xf32>
    %cst_11 = arith.constant 0.000000e+00 : f32
    %13 = vector.broadcast %cst_11 : f32 to vector<8x128xf32>
    %14 = arith.maximumf %12, %13 : vector<8x128xf32>
    %c0_12 = arith.constant 0 : index
    %c0_13 = arith.constant 0 : index
    %15 = vector.load %arg6[%c0_12, %c0_13] : memref<128x128xf32, #tpu.memory_space<vmem>>, vector<128x128xf32>
    %cst_14 = arith.constant dense<0.000000e+00> : vector<8x128xf32>
    %16 = tpu.matmul %14, %15, %cst_14 {dimension_numbers = #tpu.dot_dimension_numbers<[1], [0], [0], [1], [0, 0, 1, 1], [], []>} : vector<8x128xf32>, vector<128x128xf32>, vector<8x128xf32> -> vector<8x128xf32>
    %c0_15 = arith.constant 0 : index
    %c0_16 = arith.constant 0 : index
    %17 = vector.load %arg7[%c0_15, %c0_16] : memref<1x128xf32, #tpu.memory_space<vmem>>, vector<1x128xf32>
    %18 = vector.broadcast %17 : vector<1x128xf32> to vector<8x128xf32>
    %19 = arith.addf %16, %18 : vector<8x128xf32>
    %c0_17 = arith.constant 0 : index
    %c0_18 = arith.constant 0 : index
    %20 = vector.load %arg8[%c0_17, %c0_18] : memref<8x128xf32, #tpu.memory_space<vmem>>, vector<8x128xf32>
    tpu.vector_store %arg8[%c0_17, %c0_18], %19 {strides = array<i32>} : memref<8x128xf32, #tpu.memory_space<vmem>>, vector<8x128xf32>,
    return
  }
  func.func @transform_0(%arg0: i32) -> (i32, i32) {
    %c0_i32 = arith.constant 0 : i32
    %c0_i32_0 = arith.constant 0 : i32
    return %arg0, %c0_i32 : i32, i32
  }
  func.func @transform_1(%arg0: i32) -> (i32, i32) {
    %c0_i32 = arith.constant 0 : i32
    %c0_i32_0 = arith.constant 0 : i32
    %c0_i32_1 = arith.constant 0 : i32
    return %c0_i32, %c0_i32_0 : i32, i32
  }
  func.func @transform_2(%arg0: i32) -> (i32, i32) {
    %c0_i32 = arith.constant 0 : i32
    %c0_i32_0 = arith.constant 0 : i32
    %c0_i32_1 = arith.constant 0 : i32
    return %c0_i32, %c0_i32_0 : i32, i32
  }
  func.func @transform_3(%arg0: i32) -> (i32, i32) {
    %c0_i32 = arith.constant 0 : i32
    %c0_i32_0 = arith.constant 0 : i32
    %c0_i32_1 = arith.constant 0 : i32
    return %c0_i32, %c0_i32_0 : i32, i32
  }
  func.func @transform_4(%arg0: i32) -> (i32, i32) {
    %c0_i32 = arith.constant 0 : i32
    %c0_i32_0 = arith.constant 0 : i32
    %c0_i32_1 = arith.constant 0 : i32
    return %c0_i32, %c0_i32_0 : i32, i32
  }
  func.func @transform_5(%arg0: i32) -> (i32, i32) {
    %c0_i32 = arith.constant 0 : i32
    %c0_i32_0 = arith.constant 0 : i32
    %c0_i32_1 = arith.constant 0 : i32
    return %c0_i32, %c0_i32_0 : i32, i32
  }
  func.func @transform_6(%arg0: i32) -> (i32, i32) {
    %c0_i32 = arith.constant 0 : i32
    %c0_i32_0 = arith.constant 0 : i32
    %c0_i32_1 = arith.constant 0 : i32
    return %c0_i32, %c0_i32_0 : i32, i32
  }
  func.func @transform_7(%arg0: i32) -> (i32, i32) {
    %c0_i32 = arith.constant 0 : i32
    %c0_i32_0 = arith.constant 0 : i32
    return %arg0, %c0_i32 : i32, i32
  }
}

</mosaic_0001>

<llo_original>
// kernel: dqn_forward.1
$region0: #{dqn_forward.1}
  #allocation0 [shape = 'u32[]', space=smem, size = 0x4, offset = 0x4, fixed_abs, tag = 'smem constant byte address 0x4 - core index']
  #allocation1 [shape = 'u32[72,128]{1,0:T(1,128)}', space=vmem, size = 0x9000, scoped, tag = 'internal scratch']
  %s0 = inlined_call_operand.vmem [shape: f32[8,128], index: 0, kind: input, shape index: {}]
  %s1 = inlined_call_operand.hbm [shape: f32[128,128], index: 1, kind: input, shape index: {}]
  %s2 = inlined_call_operand.vmem [shape: f32[1,128], index: 2, kind: input, shape index: {}]
  %s3 = inlined_call_operand.hbm [shape: f32[128,128], index: 3, kind: input, shape index: {}]
  %s4 = inlined_call_operand.vmem [shape: f32[1,128], index: 4, kind: input, shape index: {}]
  %s5 = inlined_call_operand.hbm [shape: f32[128,128], index: 5, kind: input, shape index: {}]
  %s6 = inlined_call_operand.vmem [shape: f32[1,128], index: 6, kind: input, shape index: {}]
  %s7 = inlined_call_operand.vmem [shape: f32[8,128], index: 7, kind: output, shape index: {}]
  %s8 = sld [smem:[#allocation0]]
  $region50: #{dqn_forward.1} parent=0
    _
  %s10 = ssub.s32 1, %s8
  %s11 = scalar_select 0, %s10, %s8
  $region1: #{dqn_forward.1} parent=0
    #allocation2 [shape = 'u8[65536]{0}', space=vmem, size = 0x10000, scoped, tag = 'input window, operand 1, single buffered']
    #allocation3 [shape = 's32[1]{0}', space=sflag, size = 0x4, scoped, tag = 'scoped memory for dqn_forward.1']
    #allocation4 [shape = 'u8[65536]{0}', space=vmem, size = 0x10000, scoped, tag = 'input window, operand 3, single buffered']
    #allocation5 [shape = 's32[1]{0}', space=sflag, size = 0x4, scoped, tag = 'scoped memory for dqn_forward.1']
    #allocation6 [shape = 'u8[65536]{0}', space=vmem, size = 0x10000, scoped, tag = 'input window, operand 5, single buffered']
    %12 = vsyncpa [#allocation3], 0
    %13 = vsyncpa [#allocation5], 0
    // Predicated region
    $region2: #{dqn_forward.1} parent=1 // pred_check
      _
    $region3: #{dqn_forward.1} parent=1 // pred_check_branch
      %15 = sbr.rel (0) target = $region5
    $region4: #{dqn_forward.1} parent=1 // pred_region
      _
    $region5: #{dqn_forward.1} parent=1 // pred_fallthru
      _
    // Predicated region
    $region6: #{dqn_forward.1} parent=1 // pred_check
      _
    $region7: #{dqn_forward.1} parent=1 // pred_check_branch
      %17 = sbr.rel (0) target = $region9
    $region8: #{dqn_forward.1} parent=1 // pred_region
      %19 = vsyncadd [#allocation3], 0
      %s20 = sshll.u32 %s1, 4
      %s21 = int_to_ptr.hbm [resolvable:$true] %s20
      %s22 = sshll.u32 [#allocation2], 4
      %s23 = int_to_ptr.vmem [resolvable:$true] %s22
      %28 = dma.hbm_to_vmem [thread:$0]  %s21, 2048, %s23, [#allocation3], 128, 128, 8
    $region9: #{dqn_forward.1} parent=1 // pred_fallthru
      _
    // Predicated region
    $region10: #{dqn_forward.1} parent=1 // pred_check
      _
    $region11: #{dqn_forward.1} parent=1 // pred_check_branch
      %30 = sbr.rel (0) target = $region13
    $region12: #{dqn_forward.1} parent=1 // pred_region
      _
    $region13: #{dqn_forward.1} parent=1 // pred_fallthru
      _
    // Predicated region
    $region14: #{dqn_forward.1} parent=1 // pred_check
      _
    $region15: #{dqn_forward.1} parent=1 // pred_check_branch
      %32 = sbr.rel (0) target = $region17
    $region16: #{dqn_forward.1} parent=1 // pred_region
      %34 = vsyncadd [#allocation5], 0
      %s35 = sshll.u32 %s3, 4
      %s36 = int_to_ptr.hbm [resolvable:$true] %s35
      %s37 = sshll.u32 [#allocation4], 4
      %s38 = int_to_ptr.vmem [resolvable:$true] %s37
      %43 = dma.hbm_to_vmem [thread:$0]  %s36, 2048, %s38, [#allocation5], 128, 128, 8
    $region17: #{dqn_forward.1} parent=1 // pred_fallthru
      _
    // Predicated region
    $region18: #{dqn_forward.1} parent=1 // pred_check
      _
    $region19: #{dqn_forward.1} parent=1 // pred_check_branch
      %45 = sbr.rel (0) target = $region21
    $region20: #{dqn_forward.1} parent=1 // pred_region
      _
    $region21: #{dqn_forward.1} parent=1 // pred_fallthru
      _
    // Predicated region
    $region22: #{dqn_forward.1} parent=1 // pred_check
      _
    $region23: #{dqn_forward.1} parent=1 // pred_check_branch
      %47 = sbr.rel (0) target = $region25
    $region24: #{dqn_forward.1} parent=1 // pred_region
      %49 = vsyncadd [#allocation5], 0
      %s50 = sshll.u32 %s5, 4
      %s51 = int_to_ptr.hbm [resolvable:$true] %s50
      %s52 = sshll.u32 [#allocation6], 4
      %s53 = int_to_ptr.vmem [resolvable:$true] %s52
      %58 = dma.hbm_to_vmem [thread:$0]  %s51, 2048, %s53, [#allocation5], 128, 128, 8
    $region25: #{dqn_forward.1} parent=1 // pred_fallthru
      _
    // Predicated region
    $region26: #{dqn_forward.1} parent=1 // pred_check
      _
    $region27: #{dqn_forward.1} parent=1 // pred_check_branch
      %60 = sbr.rel (0) target = $region29
    $region28: #{dqn_forward.1} parent=1 // pred_region
      _
    $region29: #{dqn_forward.1} parent=1 // pred_fallthru
      _
    // Predicated region
    $region30: #{dqn_forward.1} parent=1 // pred_check
      _
    $region31: #{dqn_forward.1} parent=1 // pred_check_branch
      %62 = sbr.rel (0) target = $region33
    $region32: #{dqn_forward.1} parent=1 // pred_region
      %64 = dma.done [#allocation3], 2048
    $region33: #{dqn_forward.1} parent=1 // pred_fallthru
      _
    // Predicated region
    $region34: #{dqn_forward.1} parent=1 // pred_check
      _
    $region35: #{dqn_forward.1} parent=1 // pred_check_branch
      %66 = sbr.rel (0) target = $region37
    $region36: #{dqn_forward.1} parent=1 // pred_region
      %68 = dma.done [#allocation5], 2048
    $region37: #{dqn_forward.1} parent=1 // pred_fallthru
      _
    // Predicated region
    $region38: #{dqn_forward.1} parent=1 // pred_check
      _
    $region39: #{dqn_forward.1} parent=1 // pred_check_branch
      %70 = sbr.rel (0) target = $region41
    $region40: #{dqn_forward.1} parent=1 // pred_region
      %72 = dma.done [#allocation5], 2048
    $region41: #{dqn_forward.1} parent=1 // pred_fallthru
      _
    %v73 = vld [vmem:[%s0] sm:$0xff]
    %v74 = vld [vmem:[#allocation2] sm:$0xff]
    %v75 = vld [vmem:[#allocation2 + $0x8] sm:$0xff]
    %v76 = vld [vmem:[#allocation2 + $0x10] sm:$0xff]
    %v77 = vld [vmem:[#allocation2 + $0x18] sm:$0xff]
    %v78 = vld [vmem:[#allocation2 + $0x20] sm:$0xff]
    %v79 = vld [vmem:[#allocation2 + $0x28] sm:$0xff]
    %v80 = vld [vmem:[#allocation2 + $0x30] sm:$0xff]
    %v81 = vld [vmem:[#allocation2 + $0x38] sm:$0xff]
    %v82 = vld [vmem:[#allocation2 + $0x40] sm:$0xff]
    %v83 = vld [vmem:[#allocation2 + $0x48] sm:$0xff]
    %v84 = vld [vmem:[#allocation2 + $0x50] sm:$0xff]
    %v85 = vld [vmem:[#allocation2 + $0x58] sm:$0xff]
    %v86 = vld [vmem:[#allocation2 + $0x60] sm:$0xff]
    %v87 = vld [vmem:[#allocation2 + $0x68] sm:$0xff]
    %v88 = vld [vmem:[#allocation2 + $0x70] sm:$0xff]
    %v89 = vld [vmem:[#allocation2 + $0x78] sm:$0xff]
    %v90 = vld [vmem:[%s2] sm:$0x1]
    %v92 = vperm.slane %v90, 0
    %94 = vmatpush.msra.mxu0 %v89
    %95 = vmatpush.msra.mxu0 %v88
    %96 = vmatpush.msra.mxu0 %v87
    %97 = vmatpush.msra.mxu0 %v86
    %98 = vmatpush.msra.mxu0 %v85
    %99 = vmatpush.msra.mxu0 %v84
    %100 = vmatpush.msra.mxu0 %v83
    %101 = vmatpush.msra.mxu0 %v82
    %102 = vmatpush.msra.mxu0 %v81
    %103 = vmatpush.msra.mxu0 %v80
    %104 = vmatpush.msra.mxu0 %v79
    %105 = vmatpush.msra.mxu0 %v78
    %106 = vmatpush.msra.mxu0 %v77
    %107 = vmatpush.msra.mxu0 %v76
    %108 = vmatpush.msra.mxu0 %v75
    %109 = vmatpush.msra.mxu0 %v74
    %110 = vmatmul.f32.gmra.mxu0 %v73
    %v111 = vpop.f32.mrf.mxu0
    %v112 = vadd.f32 %v92, %v111
    %113 = vdwg.mxu0
    %v114 = vmax.f32 %v112, 0.0
    %v115 = vld [vmem:[#allocation4] sm:$0xff]
    %v116 = vld [vmem:[#allocation4 + $0x8] sm:$0xff]
    %v117 = vld [vmem:[#allocation4 + $0x10] sm:$0xff]
    %v118 = vld [vmem:[#allocation4 + $0x18] sm:$0xff]
    %v119 = vld [vmem:[#allocation4 + $0x20] sm:$0xff]
    %v120 = vld [vmem:[#allocation4 + $0x28] sm:$0xff]
    %v121 = vld [vmem:[#allocation4 + $0x30] sm:$0xff]
    %v122 = vld [vmem:[#allocation4 + $0x38] sm:$0xff]
    %v123 = vld [vmem:[#allocation4 + $0x40] sm:$0xff]
    %v124 = vld [vmem:[#allocation4 + $0x48] sm:$0xff]
    %v125 = vld [vmem:[#allocation4 + $0x50] sm:$0xff]
    %v126 = vld [vmem:[#allocation4 + $0x58] sm:$0xff]
    %v127 = vld [vmem:[#allocation4 + $0x60] sm:$0xff]
    %v128 = vld [vmem:[#allocation4 + $0x68] sm:$0xff]
    %v129 = vld [vmem:[#allocation4 + $0x70] sm:$0xff]
    %v130 = vld [vmem:[#allocation4 + $0x78] sm:$0xff]
    %v131 = vld [vmem:[%s4] sm:$0x1]
    %v133 = vperm.slane %v131, 0
    %135 = vmatpush.msra.mxu0 %v130
    %136 = vmatpush.msra.mxu0 %v129
    %137 = vmatpush.msra.mxu0 %v128
    %138 = vmatpush.msra.mxu0 %v127
    %139 = vmatpush.msra.mxu0 %v126
    %140 = vmatpush.msra.mxu0 %v125
    %141 = vmatpush.msra.mxu0 %v124
    %142 = vmatpush.msra.mxu0 %v123
    %143 = vmatpush.msra.mxu0 %v122
    %144 = vmatpush.msra.mxu0 %v121
    %145 = vmatpush.msra.mxu0 %v120
    %146 = vmatpush.msra.mxu0 %v119
    %147 = vmatpush.msra.mxu0 %v118
    %148 = vmatpush.msra.mxu0 %v117
    %149 = vmatpush.msra.mxu0 %v116
    %150 = vmatpush.msra.mxu0 %v115
    %151 = vmatmul.f32.gmra.mxu0 %v114
    %v152 = vpop.f32.mrf.mxu0
    %v153 = vadd.f32 %v133, %v152
    %154 = vdwg.mxu0
    %v155 = vmax.f32 %v153, 0.0
    %v156 = vld [vmem:[#allocation6] sm:$0xff]
    %v157 = vld [vmem:[#allocation6 + $0x8] sm:$0xff]
    %v158 = vld [vmem:[#allocation6 + $0x10] sm:$0xff]
    %v159 = vld [vmem:[#allocation6 + $0x18] sm:$0xff]
    %v160 = vld [vmem:[#allocation6 + $0x20] sm:$0xff]
    %v161 = vld [vmem:[#allocation6 + $0x28] sm:$0xff]
    %v162 = vld [vmem:[#allocation6 + $0x30] sm:$0xff]
    %v163 = vld [vmem:[#allocation6 + $0x38] sm:$0xff]
    %v164 = vld [vmem:[#allocation6 + $0x40] sm:$0xff]
    %v165 = vld [vmem:[#allocation6 + $0x48] sm:$0xff]
    %v166 = vld [vmem:[#allocation6 + $0x50] sm:$0xff]
    %v167 = vld [vmem:[#allocation6 + $0x58] sm:$0xff]
    %v168 = vld [vmem:[#allocation6 + $0x60] sm:$0xff]
    %v169 = vld [vmem:[#allocation6 + $0x68] sm:$0xff]
    %v170 = vld [vmem:[#allocation6 + $0x70] sm:$0xff]
    %v171 = vld [vmem:[#allocation6 + $0x78] sm:$0xff]
    %v172 = vld [vmem:[%s6] sm:$0x1]
    %v174 = vperm.slane %v172, 0
    %176 = vmatpush.msra.mxu0 %v171
    %177 = vmatpush.msra.mxu0 %v170
    %178 = vmatpush.msra.mxu0 %v169
    %179 = vmatpush.msra.mxu0 %v168
    %180 = vmatpush.msra.mxu0 %v167
    %181 = vmatpush.msra.mxu0 %v166
    %182 = vmatpush.msra.mxu0 %v165
    %183 = vmatpush.msra.mxu0 %v164
    %184 = vmatpush.msra.mxu0 %v163
    %185 = vmatpush.msra.mxu0 %v162
    %186 = vmatpush.msra.mxu0 %v161
    %187 = vmatpush.msra.mxu0 %v160
    %188 = vmatpush.msra.mxu0 %v159
    %189 = vmatpush.msra.mxu0 %v158
    %190 = vmatpush.msra.mxu0 %v157
    %191 = vmatpush.msra.mxu0 %v156
    %192 = vmatmul.f32.gmra.mxu0 %v155
    %v193 = vpop.f32.mrf.mxu0
    %v194 = vadd.f32 %v174, %v193
    %195 = vdwg.mxu0
    %196 = vst [vmem:[%s7] sm:$0xff] %v194
    // Predicated region
    $region42: #{dqn_forward.1} parent=1 // pred_check
      _
    $region43: #{dqn_forward.1} parent=1 // pred_check_branch
      %198 = sbr.rel (0) target = $region45
    $region44: #{dqn_forward.1} parent=1 // pred_region
      _
    $region45: #{dqn_forward.1} parent=1 // pred_fallthru
      _
    // Predicated region
    $region46: #{dqn_forward.1} parent=1 // pred_check
      _
    $region47: #{dqn_forward.1} parent=1 // pred_check_branch
      %200 = sbr.rel (0) target = $region49
    $region48: #{dqn_forward.1} parent=1 // pred_region
      _
    $region49: #{dqn_forward.1} parent=1 // pred_fallthru
      _
    %201 = vsyncpa [#allocation3], 1
    %202 = vsyncpa [#allocation5], 1

</llo_original>
